<compile_context>
chip_gen: v6e
topology: v6e:2x2x1
jax: 0.10.0
libtpu: 0.0.40
codegen_flags: <defaults>
</compile_context>

<pallas_src>
import math
import jax
import jax.numpy as jnp
from jax.experimental import pallas as pl
from jax.experimental.pallas import tpu as pltpu


def policy_mlp_kernel(x_ref, w1_ref, b1_ref, w2_ref, b2_ref, w3_ref, b3_ref,
                      out_ref):
    """One batch tile of the 3-layer MLP; all operands resident in VMEM."""
    x = x_ref[...]                                                    # [TB, D_in] bf16
    # Layer 1: Linear + ReLU (bf16 MXU matmul, f32 accumulate; f32 VPU epilogue).
    h = jnp.dot(x, w1_ref[...], preferred_element_type=jnp.float32)  # [TB, H] f32
    h = jnp.maximum(h + b1_ref[...], 0.0)
    # Layer 2: Linear + ReLU.
    h = jnp.dot(h.astype(jnp.bfloat16), w2_ref[...],
                preferred_element_type=jnp.float32)                  # [TB, H] f32
    h = jnp.maximum(h + b2_ref[...], 0.0)
    # Output layer: Linear, no activation.  Narrow (action_dim-wide) store.
    y = jnp.dot(h.astype(jnp.bfloat16), w3_ref[...],
                preferred_element_type=jnp.float32)                  # [TB, A] f32
    out_ref[...] = (y + b3_ref[...]).astype(out_ref.dtype)


def prepare_params(params):
    """One-time weight prep (outside the forward path): cast weights to bf16.

    `params` holds f32 [in,out] weights and [1,out] biases.  Biases stay f32
    (bias-add / ReLU run in f32 on the VPU).
    """
    return dict(
        w1=params["w1"].astype(jnp.bfloat16), b1=params["b1"].astype(jnp.float32),
        w2=params["w2"].astype(jnp.bfloat16), b2=params["b2"].astype(jnp.float32),
        w3=params["w3"].astype(jnp.bfloat16), b3=params["b3"].astype(jnp.float32),
    )


def _batch_tiling(batch, block_batch):
    """Pick (tile_rows, padded_batch).  Tile is a multiple of 128 whenever the
    grid has >1 step (bf16 sublane packing); tiny batches use one full tile."""
    ru = lambda x, m: -(-x // m) * m
    b8 = ru(batch, 8)
    if b8 <= 128:
        tb = b8                                      # tiny batch: single tile
    else:
        # >= 2 grid steps so both v7x TensorCores get work (no-op on v5e/v6e).
        tb = min(ru(block_batch, 128), ru(b8 // 2, 128))
        # Limit batch-padding waste (extra copy + dead compute) to ~25%.
        if ru(batch, tb) - batch > max(batch // 4, 128):
            tb = 128
    return tb, ru(batch, tb)


def policy_forward(obs, prepared, *, block_batch=512):
    """obs: [batch, obs_dim] f32.  prepared: output of prepare_params."""
    batch, obs_dim = obs.shape
    hidden_dim = prepared["w1"].shape[1]
    action_dim = prepared["w3"].shape[1]

    tb, b_pad = _batch_tiling(batch, block_batch)

    x = obs.astype(jnp.bfloat16)
    if b_pad != batch:
        x = jnp.zeros((b_pad, obs_dim), jnp.bfloat16).at[:batch].set(x)

    grid = (b_pad // tb,)

    # Weights/biases: constant block index -> stay VMEM-resident across the grid.
    pinned = lambda shape: pl.BlockSpec(shape, lambda i: (0,) * len(shape))

    flops = 2 * b_pad * (obs_dim * hidden_dim + hidden_dim * hidden_dim
                         + hidden_dim * action_dim)
    bytes_accessed = (2 * (b_pad * obs_dim + obs_dim * hidden_dim
                           + hidden_dim * hidden_dim + hidden_dim * action_dim)
                      + 4 * (b_pad * action_dim + 2 * hidden_dim + action_dim))

    out = pl.pallas_call(
        policy_mlp_kernel,
        out_shape=jax.ShapeDtypeStruct((b_pad, action_dim), jnp.float32),
        grid=grid,
        in_specs=[
            pl.BlockSpec((tb, obs_dim), lambda i: (i, 0)),   # x streams over batch
            pinned((obs_dim, hidden_dim)),
            pinned((1, hidden_dim)),
            pinned((hidden_dim, hidden_dim)),
            pinned((1, hidden_dim)),
            pinned((hidden_dim, action_dim)),
            pinned((1, action_dim)),
        ],
        # Narrow output block: last dim equals the full array extent, so the
        # 16x lane-padded writeback (and the wrapper lane-slice copy) is gone.
        out_specs=pl.BlockSpec((tb, action_dim), lambda i: (i, 0)),
        compiler_params=pltpu.CompilerParams(
            dimension_semantics=("parallel",),      # megacore sharding on v7x
            vmem_limit_bytes=32 << 20,              # covers v5e's 16 MiB default
        ),
        cost_estimate=pl.CostEstimate(
            flops=flops, transcendentals=0, bytes_accessed=bytes_accessed),
    )(x, prepared["w1"], prepared["b1"], prepared["w2"], prepared["b2"],
      prepared["w3"], prepared["b3"])

    if b_pad != batch:
        out = out[:batch]          # drop padded rows; columns already exact
    return out


def init_linear(key, in_dim, out_dim):
    """Mimic torch.nn.Linear default init (kaiming uniform, a=sqrt(5))."""
    kw, kb = jax.random.split(key)
    bound = 1.0 / math.sqrt(in_dim)
    # Weight returned already transposed to [in_dim, out_dim] for x @ W.
    w = jax.random.uniform(kw, (in_dim, out_dim), jnp.float32, -bound, bound)
    b = jax.random.uniform(kb, (1, out_dim), jnp.float32, -bound, bound)
    return w, b


def policy_reference(obs, params):
    """Plain-JAX f32 reference of the same forward pass (for verification)."""
    h = jnp.maximum(obs @ params["w1"] + params["b1"], 0.0)
    h = jnp.maximum(h @ params["w2"] + params["b2"], 0.0)
    return h @ params["w3"] + params["b3"]


if __name__ == "__main__":
    # Shapes consistent with Policy(obs_dim=32, action_dim=8, hidden_dim=128,
    # hidden_depth=2); batch=512 exercises a 2-step "parallel" batch grid.
    batch, obs_dim, hidden_dim, action_dim = 512, 32, 128, 8

    key = jax.random.PRNGKey(0)
    k_obs, k1, k2, k3 = jax.random.split(key, 4)

    obs = jax.random.normal(k_obs, (batch, obs_dim), jnp.float32)

    w1, b1 = init_linear(k1, obs_dim, hidden_dim)
    w2, b2 = init_linear(k2, hidden_dim, hidden_dim)
    w3, b3 = init_linear(k3, hidden_dim, action_dim)
    params = dict(w1=w1, b1=b1, w2=w2, b2=b2, w3=w3, b3=b3)
    prepared = prepare_params(params)   # one-time weight prep (hoisted)

    ref = policy_reference(obs, params)

    # bf16 matmul inputs with f32 accumulation -> loosened tolerance vs f32 ref.
    TOL = dict(atol=2e-2, rtol=2e-2)

    out = jax.block_until_ready(policy_forward(obs, prepared))
    assert out.shape == (batch, action_dim)
    assert jnp.allclose(out, ref, **TOL), "mismatch vs reference"

    # Tiny, non-tile-aligned batch: single full-extent tile path.
    out_small = jax.block_until_ready(policy_forward(obs[:7], prepared))
    assert jnp.allclose(out_small, ref[:7], **TOL), "small-batch mismatch"

    # Mid-size, non-aligned batch: exercises the padding-waste fallback (tb=128).
    out_mid = jax.block_until_ready(policy_forward(obs[:300], prepared))
    assert jnp.allclose(out_mid, ref[:300], **TOL), "mid-batch mismatch"

    print("KERNEL_OK")
</pallas_src>

<mosaic_0001>
module attributes {stable_mosaic.version = 11 : i64} {
  func.func @policy_mlp_kernel(%arg0: i32, %arg1: memref<256x32xbf16, #tpu.memory_space<vmem>>, %arg2: memref<32x128xbf16, #tpu.memory_space<vmem>>, %arg3: memref<1x128xf32, #tpu.memory_space<vmem>>, %arg4: memref<128x128xbf16, #tpu.memory_space<vmem>>, %arg5: memref<1x128xf32, #tpu.memory_space<vmem>>, %arg6: memref<128x8xbf16, #tpu.memory_space<vmem>>, %arg7: memref<1x8xf32, #tpu.memory_space<vmem>>, %arg8: memref<256x8xf32, #tpu.memory_space<vmem>>) attributes {dimension_semantics = [#tpu.dimension_semantics<parallel>], iteration_bounds = array<i64: 2>, scalar_prefetch = 0 : i64, scratch_operands = 0 : i64, tpu.core_type = #tpu.core_type<tc>, window_params = [{transform_indices = @transform_0, window_bounds = array<i64: 256, 32>}, {pipeline_mode = #tpu.pipeline_mode<synchronous>, transform_indices = @transform_1, window_bounds = array<i64: 32, 128>}, {pipeline_mode = #tpu.pipeline_mode<synchronous>, transform_indices = @transform_2, window_bounds = array<i64: 1, 128>}, {pipeline_mode = #tpu.pipeline_mode<synchronous>, transform_indices = @transform_3, window_bounds = array<i64: 128, 128>}, {pipeline_mode = #tpu.pipeline_mode<synchronous>, transform_indices = @transform_4, window_bounds = array<i64: 1, 128>}, {pipeline_mode = #tpu.pipeline_mode<synchronous>, transform_indices = @transform_5, window_bounds = array<i64: 128, 8>}, {pipeline_mode = #tpu.pipeline_mode<synchronous>, transform_indices = @transform_6, window_bounds = array<i64: 1, 8>}, {transform_indices = @transform_7, window_bounds = array<i64: 256, 8>}]} {
    %c0 = arith.constant 0 : index
    %c0_0 = arith.constant 0 : index
    %0 = vector.load %arg1[%c0, %c0_0] : memref<256x32xbf16, #tpu.memory_space<vmem>>, vector<256x32xbf16>
    %c0_1 = arith.constant 0 : index
    %c0_2 = arith.constant 0 : index
    %1 = vector.load %arg2[%c0_1, %c0_2] : memref<32x128xbf16, #tpu.memory_space<vmem>>, vector<32x128xbf16>
    %cst = arith.constant dense<0.000000e+00> : vector<256x128xf32>
    %2 = tpu.matmul %0, %1, %cst {dimension_numbers = #tpu.dot_dimension_numbers<[1], [0], [0], [1], [0, 0, 1, 1], [], []>} : vector<256x32xbf16>, vector<32x128xbf16>, vector<256x128xf32> -> vector<256x128xf32>
    %c0_3 = arith.constant 0 : index
    %c0_4 = arith.constant 0 : index
    %3 = vector.load %arg3[%c0_3, %c0_4] : memref<1x128xf32, #tpu.memory_space<vmem>>, vector<1x128xf32>
    %4 = vector.broadcast %3 : vector<1x128xf32> to vector<256x128xf32>
    %5 = arith.addf %2, %4 : vector<256x128xf32>
    %cst_5 = arith.constant 0.000000e+00 : f32
    %6 = vector.broadcast %cst_5 : f32 to vector<256x128xf32>
    %7 = arith.maximumf %5, %6 : vector<256x128xf32>
    %8 = arith.truncf %7 : vector<256x128xf32> to vector<256x128xbf16>
    %c0_6 = arith.constant 0 : index
    %c0_7 = arith.constant 0 : index
    %9 = vector.load %arg4[%c0_6, %c0_7] : memref<128x128xbf16, #tpu.memory_space<vmem>>, vector<128x128xbf16>
    %cst_8 = arith.constant dense<0.000000e+00> : vector<256x128xf32>
    %10 = tpu.matmul %8, %9, %cst_8 {dimension_numbers = #tpu.dot_dimension_numbers<[1], [0], [0], [1], [0, 0, 1, 1], [], []>} : vector<256x128xbf16>, vector<128x128xbf16>, vector<256x128xf32> -> vector<256x128xf32>
    %c0_9 = arith.constant 0 : index
    %c0_10 = arith.constant 0 : index
    %11 = vector.load %arg5[%c0_9, %c0_10] : memref<1x128xf32, #tpu.memory_space<vmem>>, vector<1x128xf32>
    %12 = vector.broadcast %11 : vector<1x128xf32> to vector<256x128xf32>
    %13 = arith.addf %10, %12 : vector<256x128xf32>
    %cst_11 = arith.constant 0.000000e+00 : f32
    %14 = vector.broadcast %cst_11 : f32 to vector<256x128xf32>
    %15 = arith.maximumf %13, %14 : vector<256x128xf32>
    %16 = arith.truncf %15 : vector<256x128xf32> to vector<256x128xbf16>
    %c0_12 = arith.constant 0 : index
    %c0_13 = arith.constant 0 : index
    %17 = vector.load %arg6[%c0_12, %c0_13] : memref<128x8xbf16, #tpu.memory_space<vmem>>, vector<128x8xbf16>
    %cst_14 = arith.constant dense<0.000000e+00> : vector<256x8xf32>
    %18 = tpu.matmul %16, %17, %cst_14 {dimension_numbers = #tpu.dot_dimension_numbers<[1], [0], [0], [1], [0, 0, 1, 1], [], []>} : vector<256x128xbf16>, vector<128x8xbf16>, vector<256x8xf32> -> vector<256x8xf32>
    %c0_15 = arith.constant 0 : index
    %c0_16 = arith.constant 0 : index
    %19 = vector.load %arg7[%c0_15, %c0_16] : memref<1x8xf32, #tpu.memory_space<vmem>>, vector<1x8xf32>
    %20 = vector.broadcast %19 : vector<1x8xf32> to vector<256x8xf32>
    %21 = arith.addf %18, %20 : vector<256x8xf32>
    %c0_17 = arith.constant 0 : index
    %c0_18 = arith.constant 0 : index
    %22 = vector.load %arg8[%c0_17, %c0_18] : memref<256x8xf32, #tpu.memory_space<vmem>>, vector<256x8xf32>
    tpu.vector_store %arg8[%c0_17, %c0_18], %21 {strides = array<i32>} : memref<256x8xf32, #tpu.memory_space<vmem>>, vector<256x8xf32>,
    return
  }
  func.func @transform_0(%arg0: i32) -> (i32, i32) {
    %c0_i32 = arith.constant 0 : i32
    %c0_i32_0 = arith.constant 0 : i32
    return %arg0, %c0_i32 : i32, i32
  }
  func.func @transform_1(%arg0: i32) -> (i32, i32) {
    %c0_i32 = arith.constant 0 : i32
    %c0_i32_0 = arith.constant 0 : i32
    %c0_i32_1 = arith.constant 0 : i32
    return %c0_i32, %c0_i32_0 : i32, i32
  }
  func.func @transform_2(%arg0: i32) -> (i32, i32) {
    %c0_i32 = arith.constant 0 : i32
    %c0_i32_0 = arith.constant 0 : i32
    %c0_i32_1 = arith.constant 0 : i32
    return %c0_i32, %c0_i32_0 : i32, i32
  }
  func.func @transform_3(%arg0: i32) -> (i32, i32) {
    %c0_i32 = arith.constant 0 : i32
    %c0_i32_0 = arith.constant 0 : i32
    %c0_i32_1 = arith.constant 0 : i32
    return %c0_i32, %c0_i32_0 : i32, i32
  }
  func.func @transform_4(%arg0: i32) -> (i32, i32) {
    %c0_i32 = arith.constant 0 : i32
    %c0_i32_0 = arith.constant 0 : i32
    %c0_i32_1 = arith.constant 0 : i32
    return %c0_i32, %c0_i32_0 : i32, i32
  }
  func.func @transform_5(%arg0: i32) -> (i32, i32) {
    %c0_i32 = arith.constant 0 : i32
    %c0_i32_0 = arith.constant 0 : i32
    %c0_i32_1 = arith.constant 0 : i32
    return %c0_i32, %c0_i32_0 : i32, i32
  }
  func.func @transform_6(%arg0: i32) -> (i32, i32) {
    %c0_i32 = arith.constant 0 : i32
    %c0_i32_0 = arith.constant 0 : i32
    %c0_i32_1 = arith.constant 0 : i32
    return %c0_i32, %c0_i32_0 : i32, i32
  }
  func.func @transform_7(%arg0: i32) -> (i32, i32) {
    %c0_i32 = arith.constant 0 : i32
    %c0_i32_0 = arith.constant 0 : i32
    return %arg0, %c0_i32 : i32, i32
  }
}

</mosaic_0001>

<llo_original>
// kernel: tpu_custom_call.1
$region0: #{tpu_custom_call.1}
  #allocation0 [shape = 'u32[]', space=smem, size = 0x4, offset = 0x4, fixed_abs, tag = 'smem constant byte address 0x4 - core index']
  #allocation1 [shape = 'u32[144,128]{1,0:T(1,128)}', space=vmem, size = 0x12000, scoped, tag = 'internal scratch']
  %s0 = inlined_call_operand.vmem [shape: bf16[512,32], index: 0, kind: input, shape index: {}]
  %s1 = inlined_call_operand.vmem [shape: bf16[32,128], index: 1, kind: input, shape index: {}]
  %s2 = inlined_call_operand.vmem [shape: f32[1,128], index: 2, kind: input, shape index: {}]
  %s3 = inlined_call_operand.vmem [shape: bf16[128,128], index: 3, kind: input, shape index: {}]
  %s4 = inlined_call_operand.vmem [shape: f32[1,128], index: 4, kind: input, shape index: {}]
  %s5 = inlined_call_operand.vmem [shape: bf16[128,8], index: 5, kind: input, shape index: {}]
  %s6 = inlined_call_operand.vmem [shape: f32[1,8], index: 6, kind: input, shape index: {}]
  %s7 = inlined_call_operand.vmem [shape: f32[512,8], index: 7, kind: output, shape index: {}]
  %s8 = sld [smem:[#allocation0]]
  $region61: #{tpu_custom_call.1} parent=0
    _
  %s10 = ssub.s32 1, %s8
  %s11 = scalar_select 0, %s10, %s8
  loop: start=0, step=1, limit=4
  $region2: #{tpu_custom_call.1} parent=0 // loop_pre_header
    _
  $region3: #{tpu_custom_call.1} parent=0 // loop_header
    %s13 = sphi 0, %s17
    %p14 = scmp.ge.s32.totalorder %s13, 4
    %s23 = sphi 0, %s25
    %s26 = sphi 0, %s23
    %s27 = sphi 0, %s26
    %s43 = sphi 0, %s27
    %s47 = sphi 0, %s47
    %s49 = sphi 0, %s47
    %s50 = sphi 0, %s49
    %s64 = sphi 0, %s50
    %s68 = sphi 0, %s68
    %s70 = sphi 0, %s68
    %s71 = sphi 0, %s70
    %s85 = sphi 0, %s71
    %s89 = sphi 0, %s89
    %s91 = sphi 0, %s89
    %s92 = sphi 0, %s91
    %s106 = sphi 0, %s92
    %s110 = sphi 0, %s110
    %s112 = sphi 0, %s110
    %s113 = sphi 0, %s112
    %s127 = sphi 0, %s113
    %s131 = sphi 0, %s131
    %s133 = sphi 0, %s131
    %s134 = sphi 0, %s133
    %s148 = sphi 0, %s134
    %s152 = sphi 0, %s152
    %s154 = sphi 0, %s152
    %s155 = sphi 0, %s154
    %s169 = sphi 0, %s155
    %s175 = sphi 0, %s177
    %s178 = sphi 0, %s175
    %s179 = sphi 0, %s178
    %s195 = sphi 0, %s179
  $region4: #{tpu_custom_call.1} parent=0 // loop_header_branch
    %16 = sbr.rel (%p14) target = $region8
  $region5: #{tpu_custom_call.1} parent=0 // loop_body
    %s18 = ssub.s32 %s13, 1
    %s19 = ssub.s32 %s13, 2
    %s20 = sadd.s32 %s13, 1
    %s21 = ssub.s32 %s13, %s20
    %p22 = scmp.eq.s32.totalorder %s21, 0
    %s24 = sadd.s32 %s23, 1
    %s25 = scalar_select %p22, %s23, %s24
    %p28 = pneg %p22
    %p29 = scmp.eq.s32.totalorder %s13, 1
    %p30 = por %p28, %p29
    %p31 = scmp.ne.s32.totalorder %s23, %s26
    %p32 = scmp.eq.s32.totalorder %s13, 0
    %p33 = por %p31, %p32
    %p34 = scmp.ne.s32.totalorder %s23, %s26
    %p35 = scmp.eq.s32.totalorder %s18, 1
    %p36 = por %p34, %p35
    %p37 = scmp.ne.s32.totalorder %s26, %s27
    %p38 = scmp.eq.s32.totalorder %s18, 0
    %p39 = por %p37, %p38
    %p40 = scmp.ne.s32.totalorder %s26, %s27
    %p41 = scmp.eq.s32.totalorder %s19, 1
    %p42 = por %p40, %p41
    %p44 = scmp.ne.s32.totalorder %s27, %s43
    %p45 = scmp.eq.s32.totalorder %s19, 0
    %p46 = por %p44, %p45
    %s48 = sadd.s32 %s47, 1
    %p51 = scmp.eq.s32.totalorder %s13, 1
    %p52 = scmp.ne.s32.totalorder %s47, %s49
    %p53 = scmp.eq.s32.totalorder %s13, 0
    %p54 = por %p52, %p53
    %p55 = scmp.ne.s32.totalorder %s47, %s49
    %p56 = scmp.eq.s32.totalorder %s18, 1
    %p57 = por %p55, %p56
    %p58 = scmp.ne.s32.totalorder %s49, %s50
    %p59 = scmp.eq.s32.totalorder %s18, 0
    %p60 = por %p58, %p59
    %p61 = scmp.ne.s32.totalorder %s49, %s50
    %p62 = scmp.eq.s32.totalorder %s19, 1
    %p63 = por %p61, %p62
    %p65 = scmp.ne.s32.totalorder %s50, %s64
    %p66 = scmp.eq.s32.totalorder %s19, 0
    %p67 = por %p65, %p66
    %s69 = sadd.s32 %s68, 1
    %p72 = scmp.eq.s32.totalorder %s13, 1
    %p73 = scmp.ne.s32.totalorder %s68, %s70
    %p74 = scmp.eq.s32.totalorder %s13, 0
    %p75 = por %p73, %p74
    %p76 = scmp.ne.s32.totalorder %s68, %s70
    %p77 = scmp.eq.s32.totalorder %s18, 1
    %p78 = por %p76, %p77
    %p79 = scmp.ne.s32.totalorder %s70, %s71
    %p80 = scmp.eq.s32.totalorder %s18, 0
    %p81 = por %p79, %p80
    %p82 = scmp.ne.s32.totalorder %s70, %s71
    %p83 = scmp.eq.s32.totalorder %s19, 1
    %p84 = por %p82, %p83
    %p86 = scmp.ne.s32.totalorder %s71, %s85
    %p87 = scmp.eq.s32.totalorder %s19, 0
    %p88 = por %p86, %p87
    %s90 = sadd.s32 %s89, 1
    %p93 = scmp.eq.s32.totalorder %s13, 1
    %p94 = scmp.ne.s32.totalorder %s89, %s91
    %p95 = scmp.eq.s32.totalorder %s13, 0
    %p96 = por %p94, %p95
    %p97 = scmp.ne.s32.totalorder %s89, %s91
    %p98 = scmp.eq.s32.totalorder %s18, 1
    %p99 = por %p97, %p98
    %p100 = scmp.ne.s32.totalorder %s91, %s92
    %p101 = scmp.eq.s32.totalorder %s18, 0
    %p102 = por %p100, %p101
    %p103 = scmp.ne.s32.totalorder %s91, %s92
    %p104 = scmp.eq.s32.totalorder %s19, 1
    %p105 = por %p103, %p104
    %p107 = scmp.ne.s32.totalorder %s92, %s106
    %p108 = scmp.eq.s32.totalorder %s19, 0
    %p109 = por %p107, %p108
    %s111 = sadd.s32 %s110, 1
    %p114 = scmp.eq.s32.totalorder %s13, 1
    %p115 = scmp.ne.s32.totalorder %s110, %s112
    %p116 = scmp.eq.s32.totalorder %s13, 0
    %p117 = por %p115, %p116
    %p118 = scmp.ne.s32.totalorder %s110, %s112
    %p119 = scmp.eq.s32.totalorder %s18, 1
    %p120 = por %p118, %p119
    %p121 = scmp.ne.s32.totalorder %s112, %s113
    %p122 = scmp.eq.s32.totalorder %s18, 0
    %p123 = por %p121, %p122
    %p124 = scmp.ne.s32.totalorder %s112, %s113
    %p125 = scmp.eq.s32.totalorder %s19, 1
    %p126 = por %p124, %p125
    %p128 = scmp.ne.s32.totalorder %s113, %s127
    %p129 = scmp.eq.s32.totalorder %s19, 0
    %p130 = por %p128, %p129
    %s132 = sadd.s32 %s131, 1
    %p135 = scmp.eq.s32.totalorder %s13, 1
    %p136 = scmp.ne.s32.totalorder %s131, %s133
    %p137 = scmp.eq.s32.totalorder %s13, 0
    %p138 = por %p136, %p137
    %p139 = scmp.ne.s32.totalorder %s131, %s133
    %p140 = scmp.eq.s32.totalorder %s18, 1
    %p141 = por %p139, %p140
    %p142 = scmp.ne.s32.totalorder %s133, %s134
    %p143 = scmp.eq.s32.totalorder %s18, 0
    %p144 = por %p142, %p143
    %p145 = scmp.ne.s32.totalorder %s133, %s134
    %p146 = scmp.eq.s32.totalorder %s19, 1
    %p147 = por %p145, %p146
    %p149 = scmp.ne.s32.totalorder %s134, %s148
    %p150 = scmp.eq.s32.totalorder %s19, 0
    %p151 = por %p149, %p150
    %s153 = sadd.s32 %s152, 1
    %p156 = scmp.eq.s32.totalorder %s13, 1
    %p157 = scmp.ne.s32.totalorder %s152, %s154
    %p158 = scmp.eq.s32.totalorder %s13, 0
    %p159 = por %p157, %p158
    %p160 = scmp.ne.s32.totalorder %s152, %s154
    %p161 = scmp.eq.s32.totalorder %s18, 1
    %p162 = por %p160, %p161
    %p163 = scmp.ne.s32.totalorder %s154, %s155
    %p164 = scmp.eq.s32.totalorder %s18, 0
    %p165 = por %p163, %p164
    %p166 = scmp.ne.s32.totalorder %s154, %s155
    %p167 = scmp.eq.s32.totalorder %s19, 1
    %p168 = por %p166, %p167
    %p170 = scmp.ne.s32.totalorder %s155, %s169
    %p171 = scmp.eq.s32.totalorder %s19, 0
    %p172 = por %p170, %p171
    %s173 = ssub.s32 %s13, %s20
    %p174 = scmp.eq.s32.totalorder %s173, 0
    %s176 = sadd.s32 %s175, 1
    %s177 = scalar_select %p174, %s175, %s176
    %p180 = pneg %p174
    %p181 = scmp.eq.s32.totalorder %s13, 1
    %p182 = por %p180, %p181
    %p183 = scmp.ne.s32.totalorder %s175, %s178
    %p184 = scmp.eq.s32.totalorder %s13, 0
    %p185 = por %p183, %p184
    %p186 = scmp.ne.s32.totalorder %s175, %s178
    %p187 = scmp.eq.s32.totalorder %s18, 1
    %p188 = por %p186, %p187
    %p189 = scmp.ne.s32.totalorder %s178, %s179
    %p190 = scmp.eq.s32.totalorder %s18, 0
    %p191 = por %p189, %p190
    %p192 = scmp.ne.s32.totalorder %s178, %s179
    %p193 = scmp.eq.s32.totalorder %s19, 1
    %p194 = por %p192, %p193
    %p196 = scmp.ne.s32.totalorder %s179, %s195
    %p197 = scmp.eq.s32.totalorder %s19, 0
    %p198 = por %p196, %p197
    %p199 = scmp.le.s32.totalorder 1, %s13
    %p200 = scmp.lt.s32.totalorder %s13, 3
    %p201 = pnand %p199, %p200
    %p202 = pneg %p201
    // Predicated region
    $region9: #{tpu_custom_call.1} parent=5 // pred_check
      _
    $region10: #{tpu_custom_call.1} parent=5 // pred_check_branch
      %204 = sbr.rel (%p201) target = $region12
    $region11: #{tpu_custom_call.1} parent=5 // pred_region
      %s205 = ssub.s32 %s13, 1
      // Predicated region
      $region13: #{tpu_custom_call.1} parent=11 // pred_check
        %p206 = pneg %p60
      $region14: #{tpu_custom_call.1} parent=11 // pred_check_branch
        %208 = sbr.rel (%p206) target = $region16
      $region15: #{tpu_custom_call.1} parent=11 // pred_region
        _
      $region16: #{tpu_custom_call.1} parent=11 // pred_fallthru
        _
      // Predicated region
      $region17: #{tpu_custom_call.1} parent=11 // pred_check
        %p209 = pneg %p81
      $region18: #{tpu_custom_call.1} parent=11 // pred_check_branch
        %211 = sbr.rel (%p209) target = $region20
      $region19: #{tpu_custom_call.1} parent=11 // pred_region
        _
      $region20: #{tpu_custom_call.1} parent=11 // pred_fallthru
        _
      // Predicated region
      $region21: #{tpu_custom_call.1} parent=11 // pred_check
        %p212 = pneg %p102
      $region22: #{tpu_custom_call.1} parent=11 // pred_check_branch
        %214 = sbr.rel (%p212) target = $region24
      $region23: #{tpu_custom_call.1} parent=11 // pred_region
        _
      $region24: #{tpu_custom_call.1} parent=11 // pred_fallthru
        _
      // Predicated region
      $region25: #{tpu_custom_call.1} parent=11 // pred_check
        %p215 = pneg %p123
      $region26: #{tpu_custom_call.1} parent=11 // pred_check_branch
        %217 = sbr.rel (%p215) target = $region28
      $region27: #{tpu_custom_call.1} parent=11 // pred_region
        _
      $region28: #{tpu_custom_call.1} parent=11 // pred_fallthru
        _
      // Predicated region
      $region29: #{tpu_custom_call.1} parent=11 // pred_check
        %p218 = pneg %p144
      $region30: #{tpu_custom_call.1} parent=11 // pred_check_branch
        %220 = sbr.rel (%p218) target = $region32
      $region31: #{tpu_custom_call.1} parent=11 // pred_region
        _
      $region32: #{tpu_custom_call.1} parent=11 // pred_fallthru
        _
      // Predicated region
      $region33: #{tpu_custom_call.1} parent=11 // pred_check
        %p221 = pneg %p165
      $region34: #{tpu_custom_call.1} parent=11 // pred_check_branch
        %223 = sbr.rel (%p221) target = $region36
      $region35: #{tpu_custom_call.1} parent=11 // pred_region
        _
      $region36: #{tpu_custom_call.1} parent=11 // pred_fallthru
        _
    $region12: #{tpu_custom_call.1} parent=5 // pred_fallthru
      _
    %p224 = scmp.lt.s32.totalorder %s13, 2
    // Predicated region
    $region37: #{tpu_custom_call.1} parent=5 // pred_check
      %p225 = pneg %p224
    $region38: #{tpu_custom_call.1} parent=5 // pred_check_branch
      %227 = sbr.rel (%p225) target = $region40
    $region39: #{tpu_custom_call.1} parent=5 // pred_region
      // Predicated region
      $region41: #{tpu_custom_call.1} parent=39 // pred_check
        %p228 = pneg %p33
      $region42: #{tpu_custom_call.1} parent=39 // pred_check_branch
        %230 = sbr.rel (%p228) target = $region44
      $region43: #{tpu_custom_call.1} parent=39 // pred_region
        %s231 = smul.u32 32, %s13
        %p232 = scmp.lt.s32.totalorder %s231, 63
        %s233 = scalar_select %p232, %s231, 63
        %s234 = smul.addr %s233, 4
        %s235 = scalar_lea.vmem %s0, %s234
        %s236 = smul.u32 32, %s13
      $region44: #{tpu_custom_call.1} parent=39 // pred_fallthru
        _
    $region40: #{tpu_custom_call.1} parent=5 // pred_fallthru
      _
    %p237 = scmp.le.s32.totalorder 1, %s13
    %p238 = scmp.lt.s32.totalorder %s13, 3
    %p239 = pnand %p237, %p238
    %p240 = pneg %p239
    // Predicated region
    $region45: #{tpu_custom_call.1} parent=5 // pred_check
      _
    $region46: #{tpu_custom_call.1} parent=5 // pred_check_branch
      %242 = sbr.rel (%p239) target = $region48
    $region47: #{tpu_custom_call.1} parent=5 // pred_region
      %s243 = ssub.s32 %s13, 1
      %s244 = smul.u32 32, %s18
      %p245 = scmp.lt.s32.totalorder %s244, 63
      %s246 = scalar_select %p245, %s244, 63
      %s247 = smul.addr %s246, 4
      %s248 = scalar_lea.vmem %s0, %s247
      %p249 = pneg %p39
      %p250 = pneg %p36
      %p251 = pneg %p60
      %p252 = pneg %p57
      %p253 = pneg %p81
      %p254 = pneg %p78
      %p255 = pneg %p102
      %p256 = pneg %p99
      %p257 = pneg %p123
      %p258 = pneg %p120
      %p259 = pneg %p144
      %p260 = pneg %p141
      %p261 = pneg %p165
      %p262 = pneg %p162
      %p263 = pneg %p191
      %p264 = pneg %p188
      %s265 = smul.u32 32, %s18
      %p266 = scmp.lt.s32.totalorder %s265, 63
      %s267 = scalar_select %p266, %s265, 63
      %s268 = smul.addr %s267, 8
      %s269 = scalar_lea.vmem %s7, %s268
      %s270 = smul.u32 32, %s18
      %p271 = scmp.lt.s32.totalorder %s270, 63
      %s272 = scalar_select %p271, %s270, 63
      %s273 = smul.addr %s272, 4
      %s274 = scalar_lea.vmem %s0, %s273
      %s275 = smul.u32 32, %s18
      %s276 = smul.u32 32, %s18
      %p277 = scmp.lt.s32.totalorder %s276, 63
      %s278 = scalar_select %p277, %s276, 63
      %s279 = smul.addr %s278, 8
      %s280 = scalar_lea.vmem %s7, %s279
      %s281 = smul.u32 32, %s18
      %v283 = vld [vmem:[%s274] sm:$0xf]
      %v284 = vld [vmem:[%s274 + $0x4] sm:$0xf]
      %v285 = vld [vmem:[%s274 + $0x8] sm:$0xf]
      %v286 = vld [vmem:[%s274 + $0xc] sm:$0xf]
      %v287 = vld [vmem:[%s274 + $0x10] sm:$0xf]
      %v288 = vld [vmem:[%s274 + $0x14] sm:$0xf]
      %v289 = vld [vmem:[%s274 + $0x18] sm:$0xf]
      %v290 = vld [vmem:[%s274 + $0x1c] sm:$0xf]
      %v291 = vld [vmem:[%s274 + $0x20] sm:$0xf]
      %v292 = vld [vmem:[%s274 + $0x24] sm:$0xf]
      %v293 = vld [vmem:[%s274 + $0x28] sm:$0xf]
      %v294 = vld [vmem:[%s274 + $0x2c] sm:$0xf]
      %v295 = vld [vmem:[%s274 + $0x30] sm:$0xf]
      %v296 = vld [vmem:[%s274 + $0x34] sm:$0xf]
      %v297 = vld [vmem:[%s274 + $0x38] sm:$0xf]
      %v298 = vld [vmem:[%s274 + $0x3c] sm:$0xf]
      %v299 = vld [vmem:[%s274 + $0x40] sm:$0xf]
      %v300 = vld [vmem:[%s274 + $0x44] sm:$0xf]
      %v301 = vld [vmem:[%s274 + $0x48] sm:$0xf]
      %v302 = vld [vmem:[%s274 + $0x4c] sm:$0xf]
      %v303 = vld [vmem:[%s274 + $0x50] sm:$0xf]
      %v304 = vld [vmem:[%s274 + $0x54] sm:$0xf]
      %v305 = vld [vmem:[%s274 + $0x58] sm:$0xf]
      %v306 = vld [vmem:[%s274 + $0x5c] sm:$0xf]
      %v307 = vld [vmem:[%s274 + $0x60] sm:$0xf]
      %v308 = vld [vmem:[%s274 + $0x64] sm:$0xf]
      %v309 = vld [vmem:[%s274 + $0x68] sm:$0xf]
      %v310 = vld [vmem:[%s274 + $0x6c] sm:$0xf]
      %v311 = vld [vmem:[%s274 + $0x70] sm:$0xf]
      %v312 = vld [vmem:[%s274 + $0x74] sm:$0xf]
      %v313 = vld [vmem:[%s274 + $0x78] sm:$0xf]
      %v314 = vld [vmem:[%s274 + $0x7c] sm:$0xf]
      %v315 = vld [vmem:[%s1] sm:$0xf]
      %v316 = vld [vmem:[%s1 + $0x4] sm:$0xf]
      %v317 = vld [vmem:[%s1 + $0x8] sm:$0xf]
      %v318 = vld [vmem:[%s1 + $0xc] sm:$0xf]
      %v319 = vld [vmem:[%s2] sm:$0x1]
      %v321 = vlaneseq
      %v322 = vshrl.u32 %v321, 7
      %v323 = vsub.s32 0, %v322
      %v324 = vrot.slane %v319, %v323
      %v358 = vunpack.c.l.b16 %v283
      %v359 = vunpack.c.l.b16 %v284
      %v360 = vunpack.c.l.b16 %v285
      %v361 = vunpack.c.l.b16 %v286
      %v362 = vunpack.c.l.b16 %v287
      %v363 = vunpack.c.l.b16 %v288
      %v364 = vunpack.c.l.b16 %v289
      %v365 = vunpack.c.l.b16 %v290
      %v366 = vunpack.c.l.b16 %v291
      %v367 = vunpack.c.l.b16 %v292
      %v368 = vunpack.c.l.b16 %v293
      %v369 = vunpack.c.l.b16 %v294
      %v370 = vunpack.c.l.b16 %v295
      %v371 = vunpack.c.l.b16 %v296
      %v372 = vunpack.c.l.b16 %v297
      %v373 = vunpack.c.l.b16 %v298
      %v374 = vunpack.c.l.b16 %v299
      %v375 = vunpack.c.l.b16 %v300
      %v376 = vunpack.c.l.b16 %v301
      %v377 = vunpack.c.l.b16 %v302
      %v378 = vunpack.c.l.b16 %v303
      %v379 = vunpack.c.l.b16 %v304
      %v380 = vunpack.c.l.b16 %v305
      %v381 = vunpack.c.l.b16 %v306
      %v382 = vunpack.c.l.b16 %v307
      %v383 = vunpack.c.l.b16 %v308
      %v384 = vunpack.c.l.b16 %v309
      %v385 = vunpack.c.l.b16 %v310
      %v386 = vunpack.c.l.b16 %v311
      %v387 = vunpack.c.l.b16 %v312
      %v388 = vunpack.c.l.b16 %v313
      %v389 = vunpack.c.l.b16 %v314
      %v390 = vpack.c.b16 %v359, %v358
      %v391 = vpack.c.b16 %v361, %v360
      %v392 = vpack.c.b16 %v363, %v362
      %v393 = vpack.c.b16 %v365, %v364
      %v394 = vpack.c.b16 %v367, %v366
      %v395 = vpack.c.b16 %v369, %v368
      %v396 = vpack.c.b16 %v371, %v370
      %v397 = vpack.c.b16 %v373, %v372
      %v398 = vpack.c.b16 %v375, %v374
      %v399 = vpack.c.b16 %v377, %v376
      %v400 = vpack.c.b16 %v379, %v378
      %v401 = vpack.c.b16 %v381, %v380
      %v402 = vpack.c.b16 %v383, %v382
      %v403 = vpack.c.b16 %v385, %v384
      %v404 = vpack.c.b16 %v387, %v386
      %v405 = vpack.c.b16 %v389, %v388
      %v410 = vunpack.c.l.b16 %v315
      %v411 = vunpack.c.l.b16 %v316
      %v412 = vunpack.c.l.b16 %v317
      %v413 = vunpack.c.l.b16 %v318
      %v414 = vpack.c.b16 %v411, %v410
      %v415 = vpack.c.b16 %v413, %v412
      %vm418 = vcmask 261120
      %v420 = vsel %vm418, %v390, 0
      %v423 = vsel %vm418, %v391, 0
      %v426 = vsel %vm418, %v392, 0
      %v429 = vsel %vm418, %v393, 0
      %v432 = vsel %vm418, %v394, 0
      %v435 = vsel %vm418, %v395, 0
      %v438 = vsel %vm418, %v396, 0
      %v441 = vsel %vm418, %v397, 0
      %v444 = vsel %vm418, %v398, 0
      %v447 = vsel %vm418, %v399, 0
      %v450 = vsel %vm418, %v400, 0
      %v453 = vsel %vm418, %v401, 0
      %v456 = vsel %vm418, %v402, 0
      %v459 = vsel %vm418, %v403, 0
      %v462 = vsel %vm418, %v404, 0
      %v465 = vsel %vm418, %v405, 0
      %467 = vmatprep.subr.bf16.mxu0 0
      %468 = vmatpush1.bf16.msra.mxu0 0
      %469 = vmatprep.subr.bf16.mxu0 0
      %470 = vmatpush1.bf16.msra.mxu0 0
      %471 = vmatprep.subr.bf16.mxu0 0
      %472 = vmatpush1.bf16.msra.mxu0 0
      %473 = vmatprep.subr.bf16.mxu0 0
      %474 = vmatpush1.bf16.msra.mxu0 0
      %475 = vmatprep.subr.bf16.mxu0 0
      %476 = vmatpush1.bf16.msra.mxu0 0
      %477 = vmatprep.subr.bf16.mxu0 0
      %478 = vmatpush1.bf16.msra.mxu0 0
      %479 = vmatprep.subr.bf16.mxu0 0
      %480 = vmatpush1.bf16.msra.mxu0 %v415
      %481 = vmatprep.subr.bf16.mxu0 0
      %482 = vmatpush1.bf16.msra.mxu0 %v414
      %483 = vmatprep.subr.bf16.mxu0 0
      %484 = vmatpush2.bf16.msra.mxu0 0
      %485 = vmatprep.subr.bf16.mxu0 0
      %486 = vmatpush2.bf16.msra.mxu0 0
      %487 = vmatprep.subr.bf16.mxu0 0
      %488 = vmatpush2.bf16.msra.mxu0 0
      %489 = vmatprep.subr.bf16.mxu0 0
      %490 = vmatpush2.bf16.msra.mxu0 0
      %491 = vmatprep.subr.bf16.mxu0 0
      %492 = vmatpush2.bf16.msra.mxu0 0
      %493 = vmatprep.subr.bf16.mxu0 0
      %494 = vmatpush2.bf16.msra.mxu0 0
      %495 = vmatprep.subr.bf16.mxu0 0
      %496 = vmatpush2.bf16.msra.mxu0 0
      %497 = vmatprep.subr.bf16.mxu0 0
      %498 = vmatpush2.bf16.msra.mxu0 0
      %499 = vmatprep.mubr.bf16.mxu0 0
      %500 = vmatmul.mubr.bf16.gmra.mxu0 %v420
      %v501 = vpop.f32.mrf.mxu0
      %v502 = vadd.f32 %v324, %v501
      %v503 = vpop.f32.mrf.mxu0
      %v504 = vpop.f32.mrf.mxu0
      %v505 = vadd.f32 %v324, %v504
      %v506 = vpop.f32.mrf.mxu0
      %507 = vmatprep.mubr.bf16.mxu0 0
      %508 = vmatmul.mubr.bf16.gmra.mxu0 %v423
      %v509 = vpop.f32.mrf.mxu0
      %v510 = vadd.f32 %v324, %v509
      %v511 = vpop.f32.mrf.mxu0
      %v512 = vpop.f32.mrf.mxu0
      %v513 = vadd.f32 %v324, %v512
      %v514 = vpop.f32.mrf.mxu0
      %515 = vmatprep.mubr.bf16.mxu0 0
      %516 = vmatmul.mubr.bf16.gmra.mxu0 %v426
      %v517 = vpop.f32.mrf.mxu0
      %v518 = vadd.f32 %v324, %v517
      %v519 = vpop.f32.mrf.mxu0
      %v520 = vpop.f32.mrf.mxu0
      %v521 = vadd.f32 %v324, %v520
      %v522 = vpop.f32.mrf.mxu0
      %523 = vmatprep.mubr.bf16.mxu0 0
      %524 = vmatmul.mubr.bf16.gmra.mxu0 %v429
      %v525 = vpop.f32.mrf.mxu0
      %v526 = vadd.f32 %v324, %v525
      %v527 = vpop.f32.mrf.mxu0
      %v528 = vpop.f32.mrf.mxu0
      %v529 = vadd.f32 %v324, %v528
      %v530 = vpop.f32.mrf.mxu0
      %531 = vmatprep.mubr.bf16.mxu0 0
      %532 = vmatmul.mubr.bf16.gmra.mxu0 %v432
      %v533 = vpop.f32.mrf.mxu0
      %v534 = vadd.f32 %v324, %v533
      %v535 = vpop.f32.mrf.mxu0
      %v536 = vpop.f32.mrf.mxu0
      %v537 = vadd.f32 %v324, %v536
      %v538 = vpop.f32.mrf.mxu0
      %539 = vmatprep.mubr.bf16.mxu0 0
      %540 = vmatmul.mubr.bf16.gmra.mxu0 %v435
      %v541 = vpop.f32.mrf.mxu0
      %v542 = vadd.f32 %v324, %v541
      %v543 = vpop.f32.mrf.mxu0
      %v544 = vpop.f32.mrf.mxu0
      %v545 = vadd.f32 %v324, %v544
      %v546 = vpop.f32.mrf.mxu0
      %547 = vmatprep.mubr.bf16.mxu0 0
      %548 = vmatmul.mubr.bf16.gmra.mxu0 %v438
      %v549 = vpop.f32.mrf.mxu0
      %v550 = vadd.f32 %v324, %v549
      %v551 = vpop.f32.mrf.mxu0
      %v552 = vpop.f32.mrf.mxu0
      %v553 = vadd.f32 %v324, %v552
      %v554 = vpop.f32.mrf.mxu0
      %555 = vmatprep.mubr.bf16.mxu0 0
      %556 = vmatmul.mubr.bf16.gmra.mxu0 %v441
      %v557 = vpop.f32.mrf.mxu0
      %v558 = vadd.f32 %v324, %v557
      %v559 = vpop.f32.mrf.mxu0
      %v560 = vpop.f32.mrf.mxu0
      %v561 = vadd.f32 %v324, %v560
      %v562 = vpop.f32.mrf.mxu0
      %563 = vmatprep.mubr.bf16.mxu0 0
      %564 = vmatmul.mubr.bf16.gmra.mxu0 %v444
      %v565 = vpop.f32.mrf.mxu0
      %v566 = vadd.f32 %v324, %v565
      %v567 = vpop.f32.mrf.mxu0
      %v568 = vpop.f32.mrf.mxu0
      %v569 = vadd.f32 %v324, %v568
      %v570 = vpop.f32.mrf.mxu0
      %571 = vmatprep.mubr.bf16.mxu0 0
      %572 = vmatmul.mubr.bf16.gmra.mxu0 %v447
      %v573 = vpop.f32.mrf.mxu0
      %v574 = vadd.f32 %v324, %v573
      %v575 = vpop.f32.mrf.mxu0
      %v576 = vpop.f32.mrf.mxu0
      %v577 = vadd.f32 %v324, %v576
      %v578 = vpop.f32.mrf.mxu0
      %579 = vmatprep.mubr.bf16.mxu0 0
      %580 = vmatmul.mubr.bf16.gmra.mxu0 %v450
      %v581 = vpop.f32.mrf.mxu0
      %v582 = vadd.f32 %v324, %v581
      %v583 = vpop.f32.mrf.mxu0
      %v584 = vpop.f32.mrf.mxu0
      %v585 = vadd.f32 %v324, %v584
      %v586 = vpop.f32.mrf.mxu0
      %587 = vmatprep.mubr.bf16.mxu0 0
      %588 = vmatmul.mubr.bf16.gmra.mxu0 %v453
      %v589 = vpop.f32.mrf.mxu0
      %v590 = vadd.f32 %v324, %v589
      %v591 = vpop.f32.mrf.mxu0
      %v592 = vpop.f32.mrf.mxu0
      %v593 = vadd.f32 %v324, %v592
      %v594 = vpop.f32.mrf.mxu0
      %595 = vmatprep.mubr.bf16.mxu0 0
      %596 = vmatmul.mubr.bf16.gmra.mxu0 %v456
      %v597 = vpop.f32.mrf.mxu0
      %v598 = vadd.f32 %v324, %v597
      %v599 = vpop.f32.mrf.mxu0
      %v600 = vpop.f32.mrf.mxu0
      %v601 = vadd.f32 %v324, %v600
      %v602 = vpop.f32.mrf.mxu0
      %603 = vmatprep.mubr.bf16.mxu0 0
      %604 = vmatmul.mubr.bf16.gmra.mxu0 %v459
      %v605 = vpop.f32.mrf.mxu0
      %v606 = vadd.f32 %v324, %v605
      %v607 = vpop.f32.mrf.mxu0
      %v608 = vpop.f32.mrf.mxu0
      %v609 = vadd.f32 %v324, %v608
      %v610 = vpop.f32.mrf.mxu0
      %611 = vmatprep.mubr.bf16.mxu0 0
      %612 = vmatmul.mubr.bf16.gmra.mxu0 %v462
      %v613 = vpop.f32.mrf.mxu0
      %v614 = vadd.f32 %v324, %v613
      %v615 = vpop.f32.mrf.mxu0
      %v616 = vpop.f32.mrf.mxu0
      %v617 = vadd.f32 %v324, %v616
      %v618 = vpop.f32.mrf.mxu0
      %619 = vmatprep.mubr.bf16.mxu0 0
      %620 = vmatmul.mubr.bf16.gmra.mxu0 %v465
      %v621 = vpop.f32.mrf.mxu0
      %v622 = vadd.f32 %v324, %v621
      %v623 = vpop.f32.mrf.mxu0
      %v624 = vpop.f32.mrf.mxu0
      %v625 = vadd.f32 %v324, %v624
      %v626 = vpop.f32.mrf.mxu0
      %627 = vdwg.mxu0
      %v628 = vmax.f32 %v502, 0.0
      %v629 = vmax.f32 %v505, 0.0
      %v630 = vmax.f32 %v510, 0.0
      %v631 = vmax.f32 %v513, 0.0
      %v632 = vmax.f32 %v518, 0.0
      %v633 = vmax.f32 %v521, 0.0
      %v634 = vmax.f32 %v526, 0.0
      %v635 = vmax.f32 %v529, 0.0
      %v636 = vmax.f32 %v534, 0.0
      %v637 = vmax.f32 %v537, 0.0
      %v638 = vmax.f32 %v542, 0.0
      %v639 = vmax.f32 %v545, 0.0
      %v640 = vmax.f32 %v550, 0.0
      %v641 = vmax.f32 %v553, 0.0
      %v642 = vmax.f32 %v558, 0.0
      %v643 = vmax.f32 %v561, 0.0
      %v644 = vmax.f32 %v566, 0.0
      %v645 = vmax.f32 %v569, 0.0
      %v646 = vmax.f32 %v574, 0.0
      %v647 = vmax.f32 %v577, 0.0
      %v648 = vmax.f32 %v582, 0.0
      %v649 = vmax.f32 %v585, 0.0
      %v650 = vmax.f32 %v590, 0.0
      %v651 = vmax.f32 %v593, 0.0
      %v652 = vmax.f32 %v598, 0.0
      %v653 = vmax.f32 %v601, 0.0
      %v654 = vmax.f32 %v606, 0.0
      %v655 = vmax.f32 %v609, 0.0
      %v656 = vmax.f32 %v614, 0.0
      %v657 = vmax.f32 %v617, 0.0
      %v658 = vmax.f32 %v622, 0.0
      %v659 = vmax.f32 %v625, 0.0
      %v660 = vpack.c.bf16 %v629, %v628
      %v661 = vpack.c.bf16 %v631, %v630
      %v662 = vpack.c.bf16 %v633, %v632
      %v663 = vpack.c.bf16 %v635, %v634
      %v664 = vpack.c.bf16 %v637, %v636
      %v665 = vpack.c.bf16 %v639, %v638
      %v666 = vpack.c.bf16 %v641, %v640
      %v667 = vpack.c.bf16 %v643, %v642
      %v668 = vpack.c.bf16 %v645, %v644
      %v669 = vpack.c.bf16 %v647, %v646
      %v670 = vpack.c.bf16 %v649, %v648
      %v671 = vpack.c.bf16 %v651, %v650
      %v672 = vpack.c.bf16 %v653, %v652
      %v673 = vpack.c.bf16 %v655, %v654
      %v674 = vpack.c.bf16 %v657, %v656
      %v675 = vpack.c.bf16 %v659, %v658
      %v676 = vld [vmem:[%s3] sm:$0xf]
      %v677 = vld [vmem:[%s3 + $0x4] sm:$0xf]
      %v678 = vld [vmem:[%s3 + $0x8] sm:$0xf]
      %v679 = vld [vmem:[%s3 + $0xc] sm:$0xf]
      %v680 = vld [vmem:[%s3 + $0x10] sm:$0xf]
      %v681 = vld [vmem:[%s3 + $0x14] sm:$0xf]
      %v682 = vld [vmem:[%s3 + $0x18] sm:$0xf]
      %v683 = vld [vmem:[%s3 + $0x1c] sm:$0xf]
      %v684 = vld [vmem:[%s3 + $0x20] sm:$0xf]
      %v685 = vld [vmem:[%s3 + $0x24] sm:$0xf]
      %v686 = vld [vmem:[%s3 + $0x28] sm:$0xf]
      %v687 = vld [vmem:[%s3 + $0x2c] sm:$0xf]
      %v688 = vld [vmem:[%s3 + $0x30] sm:$0xf]
      %v689 = vld [vmem:[%s3 + $0x34] sm:$0xf]
      %v690 = vld [vmem:[%s3 + $0x38] sm:$0xf]
      %v691 = vld [vmem:[%s3 + $0x3c] sm:$0xf]
      %v692 = vld [vmem:[%s4] sm:$0x1]
      %v694 = vlaneseq
      %v695 = vshrl.u32 %v694, 7
      %v696 = vsub.s32 0, %v695
      %v697 = vrot.slane %v692, %v696
      %v715 = vunpack.c.l.b16 %v676
      %v716 = vunpack.c.l.b16 %v677
      %v717 = vunpack.c.l.b16 %v678
      %v718 = vunpack.c.l.b16 %v679
      %v719 = vunpack.c.l.b16 %v680
      %v720 = vunpack.c.l.b16 %v681
      %v721 = vunpack.c.l.b16 %v682
      %v722 = vunpack.c.l.b16 %v683
      %v723 = vunpack.c.l.b16 %v684
      %v724 = vunpack.c.l.b16 %v685
      %v725 = vunpack.c.l.b16 %v686
      %v726 = vunpack.c.l.b16 %v687
      %v727 = vunpack.c.l.b16 %v688
      %v728 = vunpack.c.l.b16 %v689
      %v729 = vunpack.c.l.b16 %v690
      %v730 = vunpack.c.l.b16 %v691
      %v731 = vpack.c.b16 %v716, %v715
      %v732 = vpack.c.b16 %v718, %v717
      %v733 = vpack.c.b16 %v720, %v719
      %v734 = vpack.c.b16 %v722, %v721
      %v735 = vpack.c.b16 %v724, %v723
      %v736 = vpack.c.b16 %v726, %v725
      %v737 = vpack.c.b16 %v728, %v727
      %v738 = vpack.c.b16 %v730, %v729
      %747 = vmatprep.subr.bf16.mxu0 0
      %748 = vmatpush1.bf16.msra.mxu0 %v738
      %749 = vmatprep.subr.bf16.mxu0 0
      %750 = vmatpush1.bf16.msra.mxu0 %v737
      %751 = vmatprep.subr.bf16.mxu0 0
      %752 = vmatpush1.bf16.msra.mxu0 %v736
      %753 = vmatprep.subr.bf16.mxu0 0
      %754 = vmatpush1.bf16.msra.mxu0 %v735
      %755 = vmatprep.subr.bf16.mxu0 0
      %756 = vmatpush1.bf16.msra.mxu0 %v734
      %757 = vmatprep.subr.bf16.mxu0 0
      %758 = vmatpush1.bf16.msra.mxu0 %v733
      %759 = vmatprep.subr.bf16.mxu0 0
      %760 = vmatpush1.bf16.msra.mxu0 %v732
      %761 = vmatprep.subr.bf16.mxu0 0
      %762 = vmatpush1.bf16.msra.mxu0 %v731
      %763 = vmatprep.subr.bf16.mxu0 0
      %764 = vmatpush2.bf16.msra.mxu0 0
      %765 = vmatprep.subr.bf16.mxu0 0
      %766 = vmatpush2.bf16.msra.mxu0 0
      %767 = vmatprep.subr.bf16.mxu0 0
      %768 = vmatpush2.bf16.msra.mxu0 0
      %769 = vmatprep.subr.bf16.mxu0 0
      %770 = vmatpush2.bf16.msra.mxu0 0
      %771 = vmatprep.subr.bf16.mxu0 0
      %772 = vmatpush2.bf16.msra.mxu0 0
      %773 = vmatprep.subr.bf16.mxu0 0
      %774 = vmatpush2.bf16.msra.mxu0 0
      %775 = vmatprep.subr.bf16.mxu0 0
      %776 = vmatpush2.bf16.msra.mxu0 0
      %777 = vmatprep.subr.bf16.mxu0 0
      %778 = vmatpush2.bf16.msra.mxu0 0
      %779 = vmatprep.mubr.bf16.mxu0 0
      %780 = vmatmul.mubr.bf16.gmra.mxu0 %v660
      %v781 = vpop.f32.mrf.mxu0
      %v782 = vadd.f32 %v697, %v781
      %v783 = vpop.f32.mrf.mxu0
      %v784 = vpop.f32.mrf.mxu0
      %v785 = vadd.f32 %v697, %v784
      %v786 = vpop.f32.mrf.mxu0
      %787 = vmatprep.mubr.bf16.mxu0 0
      %788 = vmatmul.mubr.bf16.gmra.mxu0 %v661
      %v789 = vpop.f32.mrf.mxu0
      %v790 = vadd.f32 %v697, %v789
      %v791 = vpop.f32.mrf.mxu0
      %v792 = vpop.f32.mrf.mxu0
      %v793 = vadd.f32 %v697, %v792
      %v794 = vpop.f32.mrf.mxu0
      %795 = vmatprep.mubr.bf16.mxu0 0
      %796 = vmatmul.mubr.bf16.gmra.mxu0 %v662
      %v797 = vpop.f32.mrf.mxu0
      %v798 = vadd.f32 %v697, %v797
      %v799 = vpop.f32.mrf.mxu0
      %v800 = vpop.f32.mrf.mxu0
      %v801 = vadd.f32 %v697, %v800
      %v802 = vpop.f32.mrf.mxu0
      %803 = vmatprep.mubr.bf16.mxu0 0
      %804 = vmatmul.mubr.bf16.gmra.mxu0 %v663
      %v805 = vpop.f32.mrf.mxu0
      %v806 = vadd.f32 %v697, %v805
      %v807 = vpop.f32.mrf.mxu0
      %v808 = vpop.f32.mrf.mxu0
      %v809 = vadd.f32 %v697, %v808
      %v810 = vpop.f32.mrf.mxu0
      %811 = vmatprep.mubr.bf16.mxu0 0
      %812 = vmatmul.mubr.bf16.gmra.mxu0 %v664
      %v813 = vpop.f32.mrf.mxu0
      %v814 = vadd.f32 %v697, %v813
      %v815 = vpop.f32.mrf.mxu0
      %v816 = vpop.f32.mrf.mxu0
      %v817 = vadd.f32 %v697, %v816
      %v818 = vpop.f32.mrf.mxu0
      %819 = vmatprep.mubr.bf16.mxu0 0
      %820 = vmatmul.mubr.bf16.gmra.mxu0 %v665
      %v821 = vpop.f32.mrf.mxu0
      %v822 = vadd.f32 %v697, %v821
      %v823 = vpop.f32.mrf.mxu0
      %v824 = vpop.f32.mrf.mxu0
      %v825 = vadd.f32 %v697, %v824
      %v826 = vpop.f32.mrf.mxu0
      %827 = vmatprep.mubr.bf16.mxu0 0
      %828 = vmatmul.mubr.bf16.gmra.mxu0 %v666
      %v829 = vpop.f32.mrf.mxu0
      %v830 = vadd.f32 %v697, %v829
      %v831 = vpop.f32.mrf.mxu0
      %v832 = vpop.f32.mrf.mxu0
      %v833 = vadd.f32 %v697, %v832
      %v834 = vpop.f32.mrf.mxu0
      %835 = vmatprep.mubr.bf16.mxu0 0
      %836 = vmatmul.mubr.bf16.gmra.mxu0 %v667
      %v837 = vpop.f32.mrf.mxu0
      %v838 = vadd.f32 %v697, %v837
      %v839 = vpop.f32.mrf.mxu0
      %v840 = vpop.f32.mrf.mxu0
      %v841 = vadd.f32 %v697, %v840
      %v842 = vpop.f32.mrf.mxu0
      %843 = vmatprep.mubr.bf16.mxu0 0
      %844 = vmatmul.mubr.bf16.gmra.mxu0 %v668
      %v845 = vpop.f32.mrf.mxu0
      %v846 = vadd.f32 %v697, %v845
      %v847 = vpop.f32.mrf.mxu0
      %v848 = vpop.f32.mrf.mxu0
      %v849 = vadd.f32 %v697, %v848
      %v850 = vpop.f32.mrf.mxu0
      %851 = vmatprep.mubr.bf16.mxu0 0
      %852 = vmatmul.mubr.bf16.gmra.mxu0 %v669
      %v853 = vpop.f32.mrf.mxu0
      %v854 = vadd.f32 %v697, %v853
      %v855 = vpop.f32.mrf.mxu0
      %v856 = vpop.f32.mrf.mxu0
      %v857 = vadd.f32 %v697, %v856
      %v858 = vpop.f32.mrf.mxu0
      %859 = vmatprep.mubr.bf16.mxu0 0
      %860 = vmatmul.mubr.bf16.gmra.mxu0 %v670
      %v861 = vpop.f32.mrf.mxu0
      %v862 = vadd.f32 %v697, %v861
      %v863 = vpop.f32.mrf.mxu0
      %v864 = vpop.f32.mrf.mxu0
      %v865 = vadd.f32 %v697, %v864
      %v866 = vpop.f32.mrf.mxu0
      %867 = vmatprep.mubr.bf16.mxu0 0
      %868 = vmatmul.mubr.bf16.gmra.mxu0 %v671
      %v869 = vpop.f32.mrf.mxu0
      %v870 = vadd.f32 %v697, %v869
      %v871 = vpop.f32.mrf.mxu0
      %v872 = vpop.f32.mrf.mxu0
      %v873 = vadd.f32 %v697, %v872
      %v874 = vpop.f32.mrf.mxu0
      %875 = vmatprep.mubr.bf16.mxu0 0
      %876 = vmatmul.mubr.bf16.gmra.mxu0 %v672
      %v877 = vpop.f32.mrf.mxu0
      %v878 = vadd.f32 %v697, %v877
      %v879 = vpop.f32.mrf.mxu0
      %v880 = vpop.f32.mrf.mxu0
      %v881 = vadd.f32 %v697, %v880
      %v882 = vpop.f32.mrf.mxu0
      %883 = vmatprep.mubr.bf16.mxu0 0
      %884 = vmatmul.mubr.bf16.gmra.mxu0 %v673
      %v885 = vpop.f32.mrf.mxu0
      %v886 = vadd.f32 %v697, %v885
      %v887 = vpop.f32.mrf.mxu0
      %v888 = vpop.f32.mrf.mxu0
      %v889 = vadd.f32 %v697, %v888
      %v890 = vpop.f32.mrf.mxu0
      %891 = vmatprep.mubr.bf16.mxu0 0
      %892 = vmatmul.mubr.bf16.gmra.mxu0 %v674
      %v893 = vpop.f32.mrf.mxu0
      %v894 = vadd.f32 %v697, %v893
      %v895 = vpop.f32.mrf.mxu0
      %v896 = vpop.f32.mrf.mxu0
      %v897 = vadd.f32 %v697, %v896
      %v898 = vpop.f32.mrf.mxu0
      %899 = vmatprep.mubr.bf16.mxu0 0
      %900 = vmatmul.mubr.bf16.gmra.mxu0 %v675
      %v901 = vpop.f32.mrf.mxu0
      %v902 = vadd.f32 %v697, %v901
      %v903 = vpop.f32.mrf.mxu0
      %v904 = vpop.f32.mrf.mxu0
      %v905 = vadd.f32 %v697, %v904
      %v906 = vpop.f32.mrf.mxu0
      %907 = vdwg.mxu0
      %v908 = vmax.f32 %v782, 0.0
      %v909 = vmax.f32 %v785, 0.0
      %v910 = vmax.f32 %v790, 0.0
      %v911 = vmax.f32 %v793, 0.0
      %v912 = vmax.f32 %v798, 0.0
      %v913 = vmax.f32 %v801, 0.0
      %v914 = vmax.f32 %v806, 0.0
      %v915 = vmax.f32 %v809, 0.0
      %v916 = vmax.f32 %v814, 0.0
      %v917 = vmax.f32 %v817, 0.0
      %v918 = vmax.f32 %v822, 0.0
      %v919 = vmax.f32 %v825, 0.0
      %v920 = vmax.f32 %v830, 0.0
      %v921 = vmax.f32 %v833, 0.0
      %v922 = vmax.f32 %v838, 0.0
      %v923 = vmax.f32 %v841, 0.0
      %v924 = vmax.f32 %v846, 0.0
      %v925 = vmax.f32 %v849, 0.0
      %v926 = vmax.f32 %v854, 0.0
      %v927 = vmax.f32 %v857, 0.0
      %v928 = vmax.f32 %v862, 0.0
      %v929 = vmax.f32 %v865, 0.0
      %v930 = vmax.f32 %v870, 0.0
      %v931 = vmax.f32 %v873, 0.0
      %v932 = vmax.f32 %v878, 0.0
      %v933 = vmax.f32 %v881, 0.0
      %v934 = vmax.f32 %v886, 0.0
      %v935 = vmax.f32 %v889, 0.0
      %v936 = vmax.f32 %v894, 0.0
      %v937 = vmax.f32 %v897, 0.0
      %v938 = vmax.f32 %v902, 0.0
      %v939 = vmax.f32 %v905, 0.0
      %v940 = vpack.c.bf16 %v909, %v908
      %v941 = vpack.c.bf16 %v911, %v910
      %v942 = vpack.c.bf16 %v913, %v912
      %v943 = vpack.c.bf16 %v915, %v914
      %v944 = vpack.c.bf16 %v917, %v916
      %v945 = vpack.c.bf16 %v919, %v918
      %v946 = vpack.c.bf16 %v921, %v920
      %v947 = vpack.c.bf16 %v923, %v922
      %v948 = vpack.c.bf16 %v925, %v924
      %v949 = vpack.c.bf16 %v927, %v926
      %v950 = vpack.c.bf16 %v929, %v928
      %v951 = vpack.c.bf16 %v931, %v930
      %v952 = vpack.c.bf16 %v933, %v932
      %v953 = vpack.c.bf16 %v935, %v934
      %v954 = vpack.c.bf16 %v937, %v936
      %v955 = vpack.c.bf16 %v939, %v938
      %v956 = vld [vmem:[%s5] sm:$0xf]
      %v957 = vld [vmem:[%s5 + $0x4] sm:$0xf]
      %v958 = vld [vmem:[%s5 + $0x8] sm:$0xf]
      %v959 = vld [vmem:[%s5 + $0xc] sm:$0xf]
      %v960 = vld [vmem:[%s5 + $0x10] sm:$0xf]
      %v961 = vld [vmem:[%s5 + $0x14] sm:$0xf]
      %v962 = vld [vmem:[%s5 + $0x18] sm:$0xf]
      %v963 = vld [vmem:[%s5 + $0x1c] sm:$0xf]
      %v964 = vld [vmem:[%s5 + $0x20] sm:$0xf]
      %v965 = vld [vmem:[%s5 + $0x24] sm:$0xf]
      %v966 = vld [vmem:[%s5 + $0x28] sm:$0xf]
      %v967 = vld [vmem:[%s5 + $0x2c] sm:$0xf]
      %v968 = vld [vmem:[%s5 + $0x30] sm:$0xf]
      %v969 = vld [vmem:[%s5 + $0x34] sm:$0xf]
      %v970 = vld [vmem:[%s5 + $0x38] sm:$0xf]
      %v971 = vld [vmem:[%s5 + $0x3c] sm:$0xf]
      %v972 = vld [vmem:[%s6] sm:$0x1]
      %v974 = vlaneseq
      %v975 = vshrl.u32 %v974, 7
      %v976 = vsub.s32 0, %v975
      %v977 = vrot.slane %v972, %v976
      %v995 = vunpack.c.l.b16 %v956
      %v996 = vunpack.c.l.b16 %v957
      %v997 = vunpack.c.l.b16 %v958
      %v998 = vunpack.c.l.b16 %v959
      %v999 = vunpack.c.l.b16 %v960
      %v1000 = vunpack.c.l.b16 %v961
      %v1001 = vunpack.c.l.b16 %v962
      %v1002 = vunpack.c.l.b16 %v963
      %v1003 = vunpack.c.l.b16 %v964
      %v1004 = vunpack.c.l.b16 %v965
      %v1005 = vunpack.c.l.b16 %v966
      %v1006 = vunpack.c.l.b16 %v967
      %v1007 = vunpack.c.l.b16 %v968
      %v1008 = vunpack.c.l.b16 %v969
      %v1009 = vunpack.c.l.b16 %v970
      %v1010 = vunpack.c.l.b16 %v971
      %v1011 = vpack.c.b16 %v996, %v995
      %v1012 = vpack.c.b16 %v998, %v997
      %v1013 = vpack.c.b16 %v1000, %v999
      %v1014 = vpack.c.b16 %v1002, %v1001
      %v1015 = vpack.c.b16 %v1004, %v1003
      %v1016 = vpack.c.b16 %v1006, %v1005
      %v1017 = vpack.c.b16 %v1008, %v1007
      %v1018 = vpack.c.b16 %v1010, %v1009
      %1027 = vmatprep.subr.bf16.mxu0 0
      %1028 = vmatpush1.bf16.msra.mxu0 %v1018
      %1029 = vmatprep.subr.bf16.mxu0 0
      %1030 = vmatpush1.bf16.msra.mxu0 %v1017
      %1031 = vmatprep.subr.bf16.mxu0 0
      %1032 = vmatpush1.bf16.msra.mxu0 %v1016
      %1033 = vmatprep.subr.bf16.mxu0 0
      %1034 = vmatpush1.bf16.msra.mxu0 %v1015
      %1035 = vmatprep.subr.bf16.mxu0 0
      %1036 = vmatpush1.bf16.msra.mxu0 %v1014
      %1037 = vmatprep.subr.bf16.mxu0 0
      %1038 = vmatpush1.bf16.msra.mxu0 %v1013
      %1039 = vmatprep.subr.bf16.mxu0 0
      %1040 = vmatpush1.bf16.msra.mxu0 %v1012
      %1041 = vmatprep.subr.bf16.mxu0 0
      %1042 = vmatpush1.bf16.msra.mxu0 %v1011
      %1043 = vmatprep.subr.bf16.mxu0 0
      %1044 = vmatpush2.bf16.msra.mxu0 0
      %1045 = vmatprep.subr.bf16.mxu0 0
      %1046 = vmatpush2.bf16.msra.mxu0 0
      %1047 = vmatprep.subr.bf16.mxu0 0
      %1048 = vmatpush2.bf16.msra.mxu0 0
      %1049 = vmatprep.subr.bf16.mxu0 0
      %1050 = vmatpush2.bf16.msra.mxu0 0
      %1051 = vmatprep.subr.bf16.mxu0 0
      %1052 = vmatpush2.bf16.msra.mxu0 0
      %1053 = vmatprep.subr.bf16.mxu0 0
      %1054 = vmatpush2.bf16.msra.mxu0 0
      %1055 = vmatprep.subr.bf16.mxu0 0
      %1056 = vmatpush2.bf16.msra.mxu0 0
      %1057 = vmatprep.subr.bf16.mxu0 0
      %1058 = vmatpush2.bf16.msra.mxu0 0
      %1059 = vmatprep.mubr.bf16.mxu0 0
      %1060 = vmatmul.mubr.bf16.gmra.mxu0 %v940
      %v1061 = vpop.f32.mrf.mxu0
      %v1062 = vadd.f32 %v977, %v1061
      %v1063 = vpop.f32.mrf.mxu0
      %v1064 = vpop.f32.mrf.mxu0
      %v1065 = vadd.f32 %v977, %v1064
      %v1066 = vpop.f32.mrf.mxu0
      %1067 = vmatprep.mubr.bf16.mxu0 0
      %1068 = vmatmul.mubr.bf16.gmra.mxu0 %v941
      %v1069 = vpop.f32.mrf.mxu0
      %v1070 = vadd.f32 %v977, %v1069
      %v1071 = vpop.f32.mrf.mxu0
      %v1072 = vpop.f32.mrf.mxu0
      %v1073 = vadd.f32 %v977, %v1072
      %v1074 = vpop.f32.mrf.mxu0
      %1075 = vmatprep.mubr.bf16.mxu0 0
      %1076 = vmatmul.mubr.bf16.gmra.mxu0 %v942
      %v1077 = vpop.f32.mrf.mxu0
      %v1078 = vadd.f32 %v977, %v1077
      %v1079 = vpop.f32.mrf.mxu0
      %v1080 = vpop.f32.mrf.mxu0
      %v1081 = vadd.f32 %v977, %v1080
      %v1082 = vpop.f32.mrf.mxu0
      %1083 = vmatprep.mubr.bf16.mxu0 0
      %1084 = vmatmul.mubr.bf16.gmra.mxu0 %v943
      %v1085 = vpop.f32.mrf.mxu0
      %v1086 = vadd.f32 %v977, %v1085
      %v1087 = vpop.f32.mrf.mxu0
      %v1088 = vpop.f32.mrf.mxu0
      %v1089 = vadd.f32 %v977, %v1088
      %v1090 = vpop.f32.mrf.mxu0
      %1091 = vmatprep.mubr.bf16.mxu0 0
      %1092 = vmatmul.mubr.bf16.gmra.mxu0 %v944
      %v1093 = vpop.f32.mrf.mxu0
      %v1094 = vadd.f32 %v977, %v1093
      %v1095 = vpop.f32.mrf.mxu0
      %v1096 = vpop.f32.mrf.mxu0
      %v1097 = vadd.f32 %v977, %v1096
      %v1098 = vpop.f32.mrf.mxu0
      %1099 = vmatprep.mubr.bf16.mxu0 0
      %1100 = vmatmul.mubr.bf16.gmra.mxu0 %v945
      %v1101 = vpop.f32.mrf.mxu0
      %v1102 = vadd.f32 %v977, %v1101
      %v1103 = vpop.f32.mrf.mxu0
      %v1104 = vpop.f32.mrf.mxu0
      %v1105 = vadd.f32 %v977, %v1104
      %v1106 = vpop.f32.mrf.mxu0
      %1107 = vmatprep.mubr.bf16.mxu0 0
      %1108 = vmatmul.mubr.bf16.gmra.mxu0 %v946
      %v1109 = vpop.f32.mrf.mxu0
      %v1110 = vadd.f32 %v977, %v1109
      %v1111 = vpop.f32.mrf.mxu0
      %v1112 = vpop.f32.mrf.mxu0
      %v1113 = vadd.f32 %v977, %v1112
      %v1114 = vpop.f32.mrf.mxu0
      %1115 = vmatprep.mubr.bf16.mxu0 0
      %1116 = vmatmul.mubr.bf16.gmra.mxu0 %v947
      %v1117 = vpop.f32.mrf.mxu0
      %v1118 = vadd.f32 %v977, %v1117
      %v1119 = vpop.f32.mrf.mxu0
      %v1120 = vpop.f32.mrf.mxu0
      %v1121 = vadd.f32 %v977, %v1120
      %v1122 = vpop.f32.mrf.mxu0
      %1123 = vmatprep.mubr.bf16.mxu0 0
      %1124 = vmatmul.mubr.bf16.gmra.mxu0 %v948
      %v1125 = vpop.f32.mrf.mxu0
      %v1126 = vadd.f32 %v977, %v1125
      %v1127 = vpop.f32.mrf.mxu0
      %v1128 = vpop.f32.mrf.mxu0
      %v1129 = vadd.f32 %v977, %v1128
      %v1130 = vpop.f32.mrf.mxu0
      %1131 = vmatprep.mubr.bf16.mxu0 0
      %1132 = vmatmul.mubr.bf16.gmra.mxu0 %v949
      %v1133 = vpop.f32.mrf.mxu0
      %v1134 = vadd.f32 %v977, %v1133
      %v1135 = vpop.f32.mrf.mxu0
      %v1136 = vpop.f32.mrf.mxu0
      %v1137 = vadd.f32 %v977, %v1136
      %v1138 = vpop.f32.mrf.mxu0
      %1139 = vmatprep.mubr.bf16.mxu0 0
      %1140 = vmatmul.mubr.bf16.gmra.mxu0 %v950
      %v1141 = vpop.f32.mrf.mxu0
      %v1142 = vadd.f32 %v977, %v1141
      %v1143 = vpop.f32.mrf.mxu0
      %v1144 = vpop.f32.mrf.mxu0
      %v1145 = vadd.f32 %v977, %v1144
      %v1146 = vpop.f32.mrf.mxu0
      %1147 = vmatprep.mubr.bf16.mxu0 0
      %1148 = vmatmul.mubr.bf16.gmra.mxu0 %v951
      %v1149 = vpop.f32.mrf.mxu0
      %v1150 = vadd.f32 %v977, %v1149
      %v1151 = vpop.f32.mrf.mxu0
      %v1152 = vpop.f32.mrf.mxu0
      %v1153 = vadd.f32 %v977, %v1152
      %v1154 = vpop.f32.mrf.mxu0
      %1155 = vmatprep.mubr.bf16.mxu0 0
      %1156 = vmatmul.mubr.bf16.gmra.mxu0 %v952
      %v1157 = vpop.f32.mrf.mxu0
      %v1158 = vadd.f32 %v977, %v1157
      %v1159 = vpop.f32.mrf.mxu0
      %v1160 = vpop.f32.mrf.mxu0
      %v1161 = vadd.f32 %v977, %v1160
      %v1162 = vpop.f32.mrf.mxu0
      %1163 = vmatprep.mubr.bf16.mxu0 0
      %1164 = vmatmul.mubr.bf16.gmra.mxu0 %v953
      %v1165 = vpop.f32.mrf.mxu0
      %v1166 = vadd.f32 %v977, %v1165
      %v1167 = vpop.f32.mrf.mxu0
      %v1168 = vpop.f32.mrf.mxu0
      %v1169 = vadd.f32 %v977, %v1168
      %v1170 = vpop.f32.mrf.mxu0
      %1171 = vmatprep.mubr.bf16.mxu0 0
      %1172 = vmatmul.mubr.bf16.gmra.mxu0 %v954
      %v1173 = vpop.f32.mrf.mxu0
      %v1174 = vadd.f32 %v977, %v1173
      %v1175 = vpop.f32.mrf.mxu0
      %v1176 = vpop.f32.mrf.mxu0
      %v1177 = vadd.f32 %v977, %v1176
      %v1178 = vpop.f32.mrf.mxu0
      %1179 = vmatprep.mubr.bf16.mxu0 0
      %1180 = vmatmul.mubr.bf16.gmra.mxu0 %v955
      %v1181 = vpop.f32.mrf.mxu0
      %v1182 = vadd.f32 %v977, %v1181
      %v1183 = vpop.f32.mrf.mxu0
      %v1184 = vpop.f32.mrf.mxu0
      %v1185 = vadd.f32 %v977, %v1184
      %v1186 = vpop.f32.mrf.mxu0
      %1187 = vdwg.mxu0
      %vm1188 = vcmask 64512
      %1189 = vst.msk [vmem:[%s280] sm:$0xff] %vm1188, %v1062
      %1190 = vst.msk [vmem:[%s280 + $0x8] sm:$0xff] %vm1188, %v1065
      %1191 = vst.msk [vmem:[%s280 + $0x10] sm:$0xff] %vm1188, %v1070
      %1192 = vst.msk [vmem:[%s280 + $0x18] sm:$0xff] %vm1188, %v1073
      %1193 = vst.msk [vmem:[%s280 + $0x20] sm:$0xff] %vm1188, %v1078
      %1194 = vst.msk [vmem:[%s280 + $0x28] sm:$0xff] %vm1188, %v1081
      %1195 = vst.msk [vmem:[%s280 + $0x30] sm:$0xff] %vm1188, %v1086
      %1196 = vst.msk [vmem:[%s280 + $0x38] sm:$0xff] %vm1188, %v1089
      %1197 = vst.msk [vmem:[%s280 + $0x40] sm:$0xff] %vm1188, %v1094
      %1198 = vst.msk [vmem:[%s280 + $0x48] sm:$0xff] %vm1188, %v1097
      %1199 = vst.msk [vmem:[%s280 + $0x50] sm:$0xff] %vm1188, %v1102
      %1200 = vst.msk [vmem:[%s280 + $0x58] sm:$0xff] %vm1188, %v1105
      %1201 = vst.msk [vmem:[%s280 + $0x60] sm:$0xff] %vm1188, %v1110
      %1202 = vst.msk [vmem:[%s280 + $0x68] sm:$0xff] %vm1188, %v1113
      %1203 = vst.msk [vmem:[%s280 + $0x70] sm:$0xff] %vm1188, %v1118
      %1204 = vst.msk [vmem:[%s280 + $0x78] sm:$0xff] %vm1188, %v1121
      %1205 = vst.msk [vmem:[%s280 + $0x80] sm:$0xff] %vm1188, %v1126
      %1206 = vst.msk [vmem:[%s280 + $0x88] sm:$0xff] %vm1188, %v1129
      %1207 = vst.msk [vmem:[%s280 + $0x90] sm:$0xff] %vm1188, %v1134
      %1208 = vst.msk [vmem:[%s280 + $0x98] sm:$0xff] %vm1188, %v1137
      %1209 = vst.msk [vmem:[%s280 + $0xa0] sm:$0xff] %vm1188, %v1142
      %1210 = vst.msk [vmem:[%s280 + $0xa8] sm:$0xff] %vm1188, %v1145
      %1211 = vst.msk [vmem:[%s280 + $0xb0] sm:$0xff] %vm1188, %v1150
      %1212 = vst.msk [vmem:[%s280 + $0xb8] sm:$0xff] %vm1188, %v1153
      %1213 = vst.msk [vmem:[%s280 + $0xc0] sm:$0xff] %vm1188, %v1158
      %1214 = vst.msk [vmem:[%s280 + $0xc8] sm:$0xff] %vm1188, %v1161
      %1215 = vst.msk [vmem:[%s280 + $0xd0] sm:$0xff] %vm1188, %v1166
      %1216 = vst.msk [vmem:[%s280 + $0xd8] sm:$0xff] %vm1188, %v1169
      %1217 = vst.msk [vmem:[%s280 + $0xe0] sm:$0xff] %vm1188, %v1174
      %1218 = vst.msk [vmem:[%s280 + $0xe8] sm:$0xff] %vm1188, %v1177
      %1219 = vst.msk [vmem:[%s280 + $0xf0] sm:$0xff] %vm1188, %v1182
      %1220 = vst.msk [vmem:[%s280 + $0xf8] sm:$0xff] %vm1188, %v1185
      %s1221 = smul.u32 32, %s18
      %p1222 = scmp.lt.s32.totalorder %s1221, 63
      %s1223 = scalar_select %p1222, %s1221, 63
      %s1224 = smul.addr %s1223, 8
      %s1225 = scalar_lea.vmem %s7, %s1224
      // Predicated region
      $region49: #{tpu_custom_call.1} parent=47 // pred_check
        %p1226 = pneg %p188
      $region50: #{tpu_custom_call.1} parent=47 // pred_check_branch
        %1228 = sbr.rel (%p1226) target = $region52
      $region51: #{tpu_custom_call.1} parent=47 // pred_region
        %s1229 = smul.u32 32, %s18
      $region52: #{tpu_custom_call.1} parent=47 // pred_fallthru
        _
    $region48: #{tpu_custom_call.1} parent=5 // pred_fallthru
      _
    %p1230 = scmp.le.s32.totalorder 2, %s13
    // Predicated region
    $region53: #{tpu_custom_call.1} parent=5 // pred_check
      %p1231 = pneg %p1230
    $region54: #{tpu_custom_call.1} parent=5 // pred_check_branch
      %1233 = sbr.rel (%p1231) target = $region56
    $region55: #{tpu_custom_call.1} parent=5 // pred_region
      %s1234 = ssub.s32 %s13, 2
      // Predicated region
      $region57: #{tpu_custom_call.1} parent=55 // pred_check
        %p1235 = pneg %p194
      $region58: #{tpu_custom_call.1} parent=55 // pred_check_branch
        %1237 = sbr.rel (%p1235) target = $region60
      $region59: #{tpu_custom_call.1} parent=55 // pred_region
        %s1238 = smul.u32 32, %s19
        %p1239 = scmp.lt.s32.totalorder %s1238, 63
        %s1240 = scalar_select %p1239, %s1238, 63
        %s1241 = smul.addr %s1240, 8
        %s1242 = scalar_lea.vmem %s7, %s1241
      $region60: #{tpu_custom_call.1} parent=55 // pred_fallthru
        _
    $region56: #{tpu_custom_call.1} parent=5 // pred_fallthru
      _
  $region6: #{tpu_custom_call.1} parent=0 // loop_footer
    %s17 = sadd.s32 1, %s13
  $region7: #{tpu_custom_call.1} parent=0 // loop_footer_branch
    %12 = sbr.rel target = $region3
  $region8: #{tpu_custom_call.1} parent=0 // loop_exit
    _

</llo_original>
